<compile_context>
chip_gen: v7x
topology: tpu7x:2x2x1
jax: 0.10.0
libtpu: 0.0.40
codegen_flags: <defaults>
</compile_context>

<pallas_src>
import functools

import jax
import jax.numpy as jnp
from jax import lax
from jax.experimental import pallas as pl
from jax.experimental.pallas import tpu as pltpu


def _mixvpr_kernel(x_ref, w1_ref, b1_ref, w2_ref, b2_ref, wct_ref, wrt_ref,
                   bceff_ref, o_ref, acc_ref, *, depth, c_chunk, hidden_bf16):
    C, HW = acc_ref.shape
    inv_hw = 1.0 / HW
    n_chunks = C // c_chunk

    if depth == 0:  # degenerate config guard (mix_depth >= 1 in practice)
        acc_ref[...] = x_ref[0].astype(jnp.float32)

    # --- FeatureMixer stack: static unroll over depth, chunked over C ---
    for d in range(depth):
        b1d = b1_ref[d]
        if hidden_bf16:
            b1d = b1d.astype(jnp.bfloat16)
        for ci in range(n_chunks):
            c0 = ci * c_chunk
            if d == 0:
                xc = x_ref[0, pl.ds(c0, c_chunk), :].astype(jnp.float32)
            else:
                xc = acc_ref[pl.ds(c0, c_chunk), :]

            # LayerNorm, shifted two-pass form (PyTorch E[(x-mean)^2]).
            mean = jnp.sum(xc, axis=-1, keepdims=True) * inv_hw
            xm = xc - mean
            var = jnp.sum(xm * xm, axis=-1, keepdims=True) * inv_hw
            xn = (xm * lax.rsqrt(var + 1e-5)).astype(jnp.bfloat16)

            # LN affine is folded into w1_eff / b1_eff (wrapper) -> straight
            # to the MXU.  bf16 operands, f32 accumulation.
            h = jnp.dot(xn, w1_ref[d], preferred_element_type=jnp.float32)
            if hidden_bf16:
                # v6e/v7x: packed-bf16 VPU for bias + ReLU.
                h = jnp.maximum(h.astype(jnp.bfloat16) + b1d, 0)
            else:
                # v5e and older: keep elementwise in f32, cast once for MXU.
                h = jnp.maximum(h + b1d, 0.0).astype(jnp.bfloat16)
            mixed = jnp.dot(h, w2_ref[d],
                            preferred_element_type=jnp.float32) + b2_ref[d]
            acc_ref[pl.ds(c0, c_chunk), :] = xc + mixed

    # --- projections, re-associated (row-proj first) ---
    # u[c, r]  = sum_h x[c, h] * wr[r, h]          (plain A@B, big slab)
    # zt[r, o] = sum_c u[c, r] * wc[o, c] + bc_eff (trans-A on the tiny u)
    xb = acc_ref[...].astype(jnp.bfloat16)                              # (C, HW)
    u = jnp.dot(xb, wrt_ref[...], preferred_element_type=jnp.float32)  # (C, R)
    zt = lax.dot_general(u.astype(jnp.bfloat16), wct_ref[...],
                         (((0,), (0,)), ((), ())),
                         preferred_element_type=jnp.float32)            # (R, outC)
    zt = zt + bceff_ref[...]

    # Global L2 normalization over the whole descriptor (order independent).
    sq = jnp.sum(zt * zt)
    o_ref[0] = (zt * lax.rsqrt(jnp.maximum(sq, 1e-24))).astype(o_ref.dtype)


def mixvpr_pallas(x_nchw, params, *, mix_depth, out_channels, out_rows):
    lnw, lnb, w1, b1, w2, b2, wc, bc, wr, br = params
    B, C, H, W = x_nchw.shape
    HW = H * W
    HWr = w1.shape[1]
    assert wc.shape == (out_channels, C) and wr.shape == (out_rows, HW)

    # --- wrapper-side weight prep (free in XLA, keeps the kernel lean) ---
    x = x_nchw.reshape(B, C, HW).astype(jnp.float32)
    w1t = jnp.transpose(w1, (0, 2, 1)).astype(jnp.float32)       # (D, HW, HWr)
    # Fold LayerNorm affine into the first mixer linear (exact identity).
    w1_eff = (lnw[:, :, None] * w1t).astype(jnp.bfloat16)        # (D, HW, HWr)
    b1_eff = (b1 + jnp.einsum('dh,dhj->dj', lnb, w1t)).astype(jnp.float32)
    w2t = jnp.transpose(w2, (0, 2, 1)).astype(jnp.bfloat16)      # (D, HWr, HW)
    b2f = b2.astype(jnp.float32)                                 # (D, HW)
    wct = wc.T.astype(jnp.bfloat16)                              # (C, outC)
    wrt = wr.T.astype(jnp.bfloat16)                              # (HW, R)
    # Fold channel_proj bias through row_proj:
    #   bc_eff[r, o] = bc[o] * sum_h wr[r, h] + br[r]
    bc_eff = (jnp.sum(wr, axis=1, keepdims=True) * bc[None, :]
              + br[:, None]).astype(jnp.float32)                 # (R, outC)
    weight_args = (w1_eff, b1_eff, w2t, b2f, wct, wrt, bc_eff)

    # Chunk size over C for the mixer (largest divisor of C up to 256).
    c_chunk = C
    for cand in (256, 128, 64, 32, 16, 8):
        if C >= cand and C % cand == 0:
            c_chunk = cand
            break

    # bf16 elementwise hidden path only where the VPU executes packed bf16.
    try:
        kind = jax.devices()[0].device_kind.lower()
    except Exception:  # pragma: no cover
        kind = ""
    hidden_bf16 = ("v6" in kind) or ("v7" in kind)

    # VMEM budget: double-buffered I/O + weight blocks, residual scratch,
    # per-chunk f32 temporaries; clamped below the chip's physical capacity.
    nbytes = lambda a: int(a.size) * a.dtype.itemsize
    weight_bytes = sum(nbytes(a) for a in weight_args)
    io_block_bytes = C * HW * 4 + out_rows * out_channels * 4
    temp_bytes = (4 * (5 * c_chunk * HW + 2 * c_chunk * HWr
                       + C * out_rows + out_rows * out_channels)
                  + 2 * C * HW)                                  # bf16 xb copy
    needed = 2 * (io_block_bytes + weight_bytes) + C * HW * 4 + temp_bytes
    try:
        vmem_cap = int(pltpu.get_tpu_info().vmem_capacity_bytes)
    except Exception:  # pragma: no cover
        vmem_cap = 64 << 20
    vmem_limit = int(min(max(2 * needed, 32 << 20), int(0.85 * vmem_cap)))

    kernel = functools.partial(_mixvpr_kernel, depth=mix_depth,
                               c_chunk=c_chunk, hidden_bf16=hidden_bf16)
    const = lambda ndim: (lambda b: (0,) * ndim)

    out = pl.pallas_call(
        kernel,
        out_shape=jax.ShapeDtypeStruct((B, out_rows, out_channels), jnp.float32),
        grid_spec=pltpu.PrefetchScalarGridSpec(
            num_scalar_prefetch=0,
            grid=(B,),
            in_specs=[
                pl.BlockSpec((1, C, HW), lambda b: (b, 0, 0)),        # x
                pl.BlockSpec((mix_depth, HW, HWr), const(3)),         # w1_eff
                pl.BlockSpec((mix_depth, HWr), const(2)),             # b1_eff
                pl.BlockSpec((mix_depth, HWr, HW), const(3)),         # w2^T
                pl.BlockSpec((mix_depth, HW), const(2)),              # b2
                pl.BlockSpec((C, out_channels), const(2)),            # channel_proj^T
                pl.BlockSpec((HW, out_rows), const(2)),               # row_proj^T
                pl.BlockSpec((out_rows, out_channels), const(2)),     # folded bias
            ],
            out_specs=pl.BlockSpec((1, out_rows, out_channels),
                                   lambda b: (b, 0, 0)),
            scratch_shapes=[pltpu.VMEM((C, HW), jnp.float32)],        # residual
        ),
        compiler_params=pltpu.CompilerParams(
            dimension_semantics=("parallel",),
            vmem_limit_bytes=vmem_limit,
        ),
    )(x, *weight_args)

    # Layout glue only (values already L2-normalized in-kernel):
    # (B, R, outC) -> (B, outC, R) -> flatten, matching PyTorch x.flatten(1).
    return out.transpose(0, 2, 1).reshape(B, out_channels * out_rows)


def mixvpr_reference(x_nchw, params, *, mix_depth):
    """Plain-JAX f32 reference reproducing the PyTorch forward semantics."""
    lnw, lnb, w1, b1, w2, b2, wc, bc, wr, br = params
    B, C, H, W = x_nchw.shape
    x = x_nchw.reshape(B, C, H * W).astype(jnp.float32)
    for d in range(mix_depth):
        mean = jnp.mean(x, axis=-1, keepdims=True)
        var = jnp.mean((x - mean) ** 2, axis=-1, keepdims=True)
        xn = (x - mean) / jnp.sqrt(var + 1e-5) * lnw[d] + lnb[d]
        h = jnp.maximum(jnp.einsum('bch,oh->bco', xn, w1[d]) + b1[d], 0.0)
        x = x + jnp.einsum('bco,ho->bch', h, w2[d]) + b2[d]
    x = jnp.transpose(x, (0, 2, 1))                       # (B, HW, C)
    x = jnp.einsum('bhc,oc->bho', x, wc) + bc             # (B, HW, outC)
    x = jnp.transpose(x, (0, 2, 1))                       # (B, outC, HW)
    x = jnp.einsum('boh,rh->bor', x, wr) + br             # (B, outC, R)
    flat = x.reshape(B, -1)
    norm = jnp.sqrt(jnp.sum(flat * flat, axis=-1, keepdims=True))
    return flat / jnp.maximum(norm, 1e-12)


def make_params(key, *, in_channels, hw, out_channels, out_rows, mix_depth,
                mlp_ratio):
    hwr = int(hw * mlp_ratio)
    ks = jax.random.split(key, 8)
    # LayerNorm params perturbed from the PyTorch default so they are exercised.
    lnw = 1.0 + 0.1 * jax.random.normal(ks[0], (mix_depth, hw), jnp.float32)
    lnb = 0.05 * jax.random.normal(ks[1], (mix_depth, hw), jnp.float32)
    # trunc_normal_(std=0.02) approximated with a plain normal (synthetic).
    w1 = 0.02 * jax.random.normal(ks[2], (mix_depth, hwr, hw), jnp.float32)
    b1 = jnp.zeros((mix_depth, hwr), jnp.float32)
    w2 = 0.02 * jax.random.normal(ks[3], (mix_depth, hw, hwr), jnp.float32)
    b2 = jnp.zeros((mix_depth, hw), jnp.float32)
    wc = 0.05 * jax.random.normal(ks[4], (out_channels, in_channels), jnp.float32)
    bc = 0.05 * jax.random.normal(ks[5], (out_channels,), jnp.float32)
    wr = 0.05 * jax.random.normal(ks[6], (out_rows, hw), jnp.float32)
    br = 0.05 * jax.random.normal(ks[7], (out_rows,), jnp.float32)
    return (lnw, lnb, w1, b1, w2, b2, wc, bc, wr, br)


if __name__ == "__main__":
    # Small MixVPR-consistent shapes: B=2, in_channels=32, in_h=in_w=4 (HW=16),
    # out_channels=32, mix_depth=2, mlp_ratio=1, out_rows=4.
    B, C, H, W = 2, 32, 4, 4
    OUT_C, OUT_ROWS, DEPTH, RATIO = 32, 4, 2, 1
    HW = H * W

    key = jax.random.PRNGKey(0)
    kx, kp = jax.random.split(key)
    x = jax.random.normal(kx, (B, C, H, W), jnp.float32)
    params = make_params(kp, in_channels=C, hw=HW, out_channels=OUT_C,
                         out_rows=OUT_ROWS, mix_depth=DEPTH, mlp_ratio=RATIO)

    out = mixvpr_pallas(x, params, mix_depth=DEPTH,
                        out_channels=OUT_C, out_rows=OUT_ROWS)
    out = jax.block_until_ready(out)

    ref = mixvpr_reference(x, params, mix_depth=DEPTH)
    assert out.shape == (B, OUT_C * OUT_ROWS), out.shape
    err = float(jnp.max(jnp.abs(out - ref)))
    # bf16 MXU operands (and bf16 hidden path on v6e/v7x) -> relaxed tolerance.
    assert err < 2e-2, err

    print("KERNEL_OK")
</pallas_src>

<mosaic_0001>
module attributes {stable_mosaic.version = 11 : i64} {
  func.func @_mixvpr_kernel(%arg0: i32, %arg1: memref<1x32x16xf32, #tpu.memory_space<vmem>>, %arg2: memref<2x16x16xbf16, #tpu.memory_space<vmem>>, %arg3: memref<2x16xf32, #tpu.memory_space<vmem>>, %arg4: memref<2x16x16xbf16, #tpu.memory_space<vmem>>, %arg5: memref<2x16xf32, #tpu.memory_space<vmem>>, %arg6: memref<32x32xbf16, #tpu.memory_space<vmem>>, %arg7: memref<16x4xbf16, #tpu.memory_space<vmem>>, %arg8: memref<4x32xf32, #tpu.memory_space<vmem>>, %arg9: memref<1x4x32xf32, #tpu.memory_space<vmem>>, %arg10: memref<32x16xf32, #tpu.memory_space<vmem>>) attributes {dimension_semantics = [#tpu.dimension_semantics<parallel>], iteration_bounds = array<i64: 2>, scalar_prefetch = 0 : i64, scratch_operands = 1 : i64, tpu.core_type = #tpu.core_type<tc>, window_params = [{transform_indices = @transform_0, window_bounds = array<i64: 1, 32, 16>}, {pipeline_mode = #tpu.pipeline_mode<synchronous>, transform_indices = @transform_1, window_bounds = array<i64: 2, 16, 16>}, {pipeline_mode = #tpu.pipeline_mode<synchronous>, transform_indices = @transform_2, window_bounds = array<i64: 2, 16>}, {pipeline_mode = #tpu.pipeline_mode<synchronous>, transform_indices = @transform_3, window_bounds = array<i64: 2, 16, 16>}, {pipeline_mode = #tpu.pipeline_mode<synchronous>, transform_indices = @transform_4, window_bounds = array<i64: 2, 16>}, {pipeline_mode = #tpu.pipeline_mode<synchronous>, transform_indices = @transform_5, window_bounds = array<i64: 32, 32>}, {pipeline_mode = #tpu.pipeline_mode<synchronous>, transform_indices = @transform_6, window_bounds = array<i64: 16, 4>}, {pipeline_mode = #tpu.pipeline_mode<synchronous>, transform_indices = @transform_7, window_bounds = array<i64: 4, 32>}, {transform_indices = @transform_8, window_bounds = array<i64: 1, 4, 32>}]} {
    %c0 = arith.constant 0 : index
    %c0_0 = arith.constant 0 : index
    %0 = vector.load %arg3[%c0, %c0_0] : memref<2x16xf32, #tpu.memory_space<vmem>>, vector<1x16xf32>
    %1 = vector.shape_cast %0 : vector<1x16xf32> to vector<16xf32>
    %c0_1 = arith.constant 0 : index
    %c0_2 = arith.constant 0 : index
    %c0_3 = arith.constant 0 : index
    %2 = vector.load %arg1[%c0_1, %c0_2, %c0_3] : memref<1x32x16xf32, #tpu.memory_space<vmem>>, vector<1x32x16xf32>
    %3 = vector.shape_cast %2 : vector<1x32x16xf32> to vector<32x16xf32>
    %cst = arith.constant dense<0.000000e+00> : vector<32xf32>
    %4 = vector.multi_reduction <add>, %3, %cst [1] : vector<32x16xf32> to vector<32xf32>
    %5 = vector.shape_cast %4 : vector<32xf32> to vector<32x1xf32>
    %cst_4 = arith.constant 6.250000e-02 : f32
    %6 = vector.broadcast %cst_4 : f32 to vector<32x1xf32>
    %7 = arith.mulf %5, %6 : vector<32x1xf32>
    %8 = vector.broadcast %7 : vector<32x1xf32> to vector<32x16xf32>
    %9 = arith.subf %3, %8 : vector<32x16xf32>
    %10 = arith.mulf %9, %9 : vector<32x16xf32>
    %cst_5 = arith.constant dense<0.000000e+00> : vector<32xf32>
    %11 = vector.multi_reduction <add>, %10, %cst_5 [1] : vector<32x16xf32> to vector<32xf32>
    %12 = vector.shape_cast %11 : vector<32xf32> to vector<32x1xf32>
    %cst_6 = arith.constant 6.250000e-02 : f32
    %13 = vector.broadcast %cst_6 : f32 to vector<32x1xf32>
    %14 = arith.mulf %12, %13 : vector<32x1xf32>
    %cst_7 = arith.constant 9.99999974E-6 : f32
    %15 = vector.broadcast %cst_7 : f32 to vector<32x1xf32>
    %16 = arith.addf %14, %15 : vector<32x1xf32>
    %17 = math.rsqrt %16 : vector<32x1xf32>
    %18 = vector.broadcast %17 : vector<32x1xf32> to vector<32x16xf32>
    %19 = arith.mulf %9, %18 : vector<32x16xf32>
    %20 = arith.truncf %19 : vector<32x16xf32> to vector<32x16xbf16>
    %c0_8 = arith.constant 0 : index
    %c0_9 = arith.constant 0 : index
    %c0_10 = arith.constant 0 : index
    %21 = vector.load %arg2[%c0_8, %c0_9, %c0_10] : memref<2x16x16xbf16, #tpu.memory_space<vmem>>, vector<1x16x16xbf16>
    %22 = vector.shape_cast %21 : vector<1x16x16xbf16> to vector<16x16xbf16>
    %cst_11 = arith.constant dense<0.000000e+00> : vector<32x16xf32>
    %23 = tpu.matmul %20, %22, %cst_11 {dimension_numbers = #tpu.dot_dimension_numbers<[1], [0], [0], [1], [0, 0, 1, 1], [], []>} : vector<32x16xbf16>, vector<16x16xbf16>, vector<32x16xf32> -> vector<32x16xf32>
    %24 = vector.shape_cast %1 : vector<16xf32> to vector<1x16xf32>
    %25 = vector.broadcast %24 : vector<1x16xf32> to vector<32x16xf32>
    %26 = arith.addf %23, %25 : vector<32x16xf32>
    %cst_12 = arith.constant 0.000000e+00 : f32
    %27 = vector.broadcast %cst_12 : f32 to vector<32x16xf32>
    %28 = arith.maximumf %26, %27 : vector<32x16xf32>
    %29 = arith.truncf %28 : vector<32x16xf32> to vector<32x16xbf16>
    %c0_13 = arith.constant 0 : index
    %c0_14 = arith.constant 0 : index
    %c0_15 = arith.constant 0 : index
    %30 = vector.load %arg4[%c0_13, %c0_14, %c0_15] : memref<2x16x16xbf16, #tpu.memory_space<vmem>>, vector<1x16x16xbf16>
    %31 = vector.shape_cast %30 : vector<1x16x16xbf16> to vector<16x16xbf16>
    %cst_16 = arith.constant dense<0.000000e+00> : vector<32x16xf32>
    %32 = tpu.matmul %29, %31, %cst_16 {dimension_numbers = #tpu.dot_dimension_numbers<[1], [0], [0], [1], [0, 0, 1, 1], [], []>} : vector<32x16xbf16>, vector<16x16xbf16>, vector<32x16xf32> -> vector<32x16xf32>
    %c0_17 = arith.constant 0 : index
    %c0_18 = arith.constant 0 : index
    %33 = vector.load %arg5[%c0_17, %c0_18] : memref<2x16xf32, #tpu.memory_space<vmem>>, vector<1x16xf32>
    %34 = vector.shape_cast %33 : vector<1x16xf32> to vector<16xf32>
    %35 = vector.shape_cast %34 : vector<16xf32> to vector<1x16xf32>
    %36 = vector.broadcast %35 : vector<1x16xf32> to vector<32x16xf32>
    %37 = arith.addf %32, %36 : vector<32x16xf32>
    %38 = arith.addf %3, %37 : vector<32x16xf32>
    %c0_19 = arith.constant 0 : index
    %c0_20 = arith.constant 0 : index
    %39 = vector.load %arg10[%c0_19, %c0_20] : memref<32x16xf32, #tpu.memory_space<vmem>>, vector<32x16xf32>
    tpu.vector_store %arg10[%c0_19, %c0_20], %38 {strides = array<i32>} : memref<32x16xf32, #tpu.memory_space<vmem>>, vector<32x16xf32>,
    %c1 = arith.constant 1 : index
    %c0_21 = arith.constant 0 : index
    %40 = vector.load %arg3[%c1, %c0_21] : memref<2x16xf32, #tpu.memory_space<vmem>>, vector<1x16xf32>
    %41 = vector.shape_cast %40 : vector<1x16xf32> to vector<16xf32>
    %c0_22 = arith.constant 0 : index
    %c0_23 = arith.constant 0 : index
    %42 = vector.load %arg10[%c0_22, %c0_23] : memref<32x16xf32, #tpu.memory_space<vmem>>, vector<32x16xf32>
    %cst_24 = arith.constant dense<0.000000e+00> : vector<32xf32>
    %43 = vector.multi_reduction <add>, %42, %cst_24 [1] : vector<32x16xf32> to vector<32xf32>
    %44 = vector.shape_cast %43 : vector<32xf32> to vector<32x1xf32>
    %cst_25 = arith.constant 6.250000e-02 : f32
    %45 = vector.broadcast %cst_25 : f32 to vector<32x1xf32>
    %46 = arith.mulf %44, %45 : vector<32x1xf32>
    %47 = vector.broadcast %46 : vector<32x1xf32> to vector<32x16xf32>
    %48 = arith.subf %42, %47 : vector<32x16xf32>
    %49 = arith.mulf %48, %48 : vector<32x16xf32>
    %cst_26 = arith.constant dense<0.000000e+00> : vector<32xf32>
    %50 = vector.multi_reduction <add>, %49, %cst_26 [1] : vector<32x16xf32> to vector<32xf32>
    %51 = vector.shape_cast %50 : vector<32xf32> to vector<32x1xf32>
    %cst_27 = arith.constant 6.250000e-02 : f32
    %52 = vector.broadcast %cst_27 : f32 to vector<32x1xf32>
    %53 = arith.mulf %51, %52 : vector<32x1xf32>
    %cst_28 = arith.constant 9.99999974E-6 : f32
    %54 = vector.broadcast %cst_28 : f32 to vector<32x1xf32>
    %55 = arith.addf %53, %54 : vector<32x1xf32>
    %56 = math.rsqrt %55 : vector<32x1xf32>
    %57 = vector.broadcast %56 : vector<32x1xf32> to vector<32x16xf32>
    %58 = arith.mulf %48, %57 : vector<32x16xf32>
    %59 = arith.truncf %58 : vector<32x16xf32> to vector<32x16xbf16>
    %c1_29 = arith.constant 1 : index
    %c0_30 = arith.constant 0 : index
    %c0_31 = arith.constant 0 : index
    %60 = vector.load %arg2[%c1_29, %c0_30, %c0_31] : memref<2x16x16xbf16, #tpu.memory_space<vmem>>, vector<1x16x16xbf16>
    %61 = vector.shape_cast %60 : vector<1x16x16xbf16> to vector<16x16xbf16>
    %cst_32 = arith.constant dense<0.000000e+00> : vector<32x16xf32>
    %62 = tpu.matmul %59, %61, %cst_32 {dimension_numbers = #tpu.dot_dimension_numbers<[1], [0], [0], [1], [0, 0, 1, 1], [], []>} : vector<32x16xbf16>, vector<16x16xbf16>, vector<32x16xf32> -> vector<32x16xf32>
    %63 = vector.shape_cast %41 : vector<16xf32> to vector<1x16xf32>
    %64 = vector.broadcast %63 : vector<1x16xf32> to vector<32x16xf32>
    %65 = arith.addf %62, %64 : vector<32x16xf32>
    %cst_33 = arith.constant 0.000000e+00 : f32
    %66 = vector.broadcast %cst_33 : f32 to vector<32x16xf32>
    %67 = arith.maximumf %65, %66 : vector<32x16xf32>
    %68 = arith.truncf %67 : vector<32x16xf32> to vector<32x16xbf16>
    %c1_34 = arith.constant 1 : index
    %c0_35 = arith.constant 0 : index
    %c0_36 = arith.constant 0 : index
    %69 = vector.load %arg4[%c1_34, %c0_35, %c0_36] : memref<2x16x16xbf16, #tpu.memory_space<vmem>>, vector<1x16x16xbf16>
    %70 = vector.shape_cast %69 : vector<1x16x16xbf16> to vector<16x16xbf16>
    %cst_37 = arith.constant dense<0.000000e+00> : vector<32x16xf32>
    %71 = tpu.matmul %68, %70, %cst_37 {dimension_numbers = #tpu.dot_dimension_numbers<[1], [0], [0], [1], [0, 0, 1, 1], [], []>} : vector<32x16xbf16>, vector<16x16xbf16>, vector<32x16xf32> -> vector<32x16xf32>
    %c1_38 = arith.constant 1 : index
    %c0_39 = arith.constant 0 : index
    %72 = vector.load %arg5[%c1_38, %c0_39] : memref<2x16xf32, #tpu.memory_space<vmem>>, vector<1x16xf32>
    %73 = vector.shape_cast %72 : vector<1x16xf32> to vector<16xf32>
    %74 = vector.shape_cast %73 : vector<16xf32> to vector<1x16xf32>
    %75 = vector.broadcast %74 : vector<1x16xf32> to vector<32x16xf32>
    %76 = arith.addf %71, %75 : vector<32x16xf32>
    %77 = arith.addf %42, %76 : vector<32x16xf32>
    %c0_40 = arith.constant 0 : index
    %c0_41 = arith.constant 0 : index
    %78 = vector.load %arg10[%c0_40, %c0_41] : memref<32x16xf32, #tpu.memory_space<vmem>>, vector<32x16xf32>
    tpu.vector_store %arg10[%c0_40, %c0_41], %77 {strides = array<i32>} : memref<32x16xf32, #tpu.memory_space<vmem>>, vector<32x16xf32>,
    %c0_42 = arith.constant 0 : index
    %c0_43 = arith.constant 0 : index
    %79 = vector.load %arg10[%c0_42, %c0_43] : memref<32x16xf32, #tpu.memory_space<vmem>>, vector<32x16xf32>
    %80 = arith.truncf %79 : vector<32x16xf32> to vector<32x16xbf16>
    %c0_44 = arith.constant 0 : index
    %c0_45 = arith.constant 0 : index
    %81 = vector.load %arg7[%c0_44, %c0_45] : memref<16x4xbf16, #tpu.memory_space<vmem>>, vector<16x4xbf16>
    %cst_46 = arith.constant dense<0.000000e+00> : vector<32x4xf32>
    %82 = tpu.matmul %80, %81, %cst_46 {dimension_numbers = #tpu.dot_dimension_numbers<[1], [0], [0], [1], [0, 0, 1, 1], [], []>} : vector<32x16xbf16>, vector<16x4xbf16>, vector<32x4xf32> -> vector<32x4xf32>
    %83 = arith.truncf %82 : vector<32x4xf32> to vector<32x4xbf16>
    %c0_47 = arith.constant 0 : index
    %c0_48 = arith.constant 0 : index
    %84 = vector.load %arg6[%c0_47, %c0_48] : memref<32x32xbf16, #tpu.memory_space<vmem>>, vector<32x32xbf16>
    %cst_49 = arith.constant dense<0.000000e+00> : vector<4x32xf32>
    %85 = tpu.matmul %83, %84, %cst_49 {dimension_numbers = #tpu.dot_dimension_numbers<[0], [0], [1], [1], [0, 1, 1, 1], [], []>} : vector<32x4xbf16>, vector<32x32xbf16>, vector<4x32xf32> -> vector<4x32xf32>
    %c0_50 = arith.constant 0 : index
    %c0_51 = arith.constant 0 : index
    %86 = vector.load %arg8[%c0_50, %c0_51] : memref<4x32xf32, #tpu.memory_space<vmem>>, vector<4x32xf32>
    %87 = arith.addf %85, %86 : vector<4x32xf32>
    %88 = arith.mulf %87, %87 : vector<4x32xf32>
    %89 = vector.shape_cast %88 : vector<4x32xf32> to vector<1x4x32xf32>
    %cst_52 = arith.constant dense<0.000000e+00> : vector<1xf32>
    %90 = vector.multi_reduction <add>, %89, %cst_52 [1, 2] : vector<1x4x32xf32> to vector<1xf32>
    %91 = vector.shape_cast %90 : vector<1xf32> to vector<1x1x1xf32>
    %92 = vector.extract %91[0, 0, 0] : f32 from vector<1x1x1xf32>
    %cst_53 = arith.constant 1.000000e-24 : f32
    %93 = arith.maximumf %92, %cst_53 : f32
    %94 = math.rsqrt %93 : f32
    %95 = vector.broadcast %94 : f32 to vector<4x32xf32>
    %96 = arith.mulf %87, %95 : vector<4x32xf32>
    %c0_54 = arith.constant 0 : index
    %c0_55 = arith.constant 0 : index
    %c0_56 = arith.constant 0 : index
    %97 = vector.load %arg9[%c0_54, %c0_55, %c0_56] : memref<1x4x32xf32, #tpu.memory_space<vmem>>, vector<1x4x32xf32>
    %98 = vector.shape_cast %97 : vector<1x4x32xf32> to vector<4x32xf32>
    %99 = vector.shape_cast %96 : vector<4x32xf32> to vector<1x4x32xf32>
    tpu.vector_store %arg9[%c0_54, %c0_55, %c0_56], %99 {strides = array<i32>} : memref<1x4x32xf32, #tpu.memory_space<vmem>>, vector<1x4x32xf32>,
    return
  }
  func.func @transform_0(%arg0: i32) -> (i32, i32, i32) {
    %c0_i32 = arith.constant 0 : i32
    %c0_i32_0 = arith.constant 0 : i32
    %c0_i32_1 = arith.constant 0 : i32
    return %arg0, %c0_i32, %c0_i32_0 : i32, i32, i32
  }
  func.func @transform_1(%arg0: i32) -> (i32, i32, i32) {
    %c0_i32 = arith.constant 0 : i32
    %c0_i32_0 = arith.constant 0 : i32
    %c0_i32_1 = arith.constant 0 : i32
    %c0_i32_2 = arith.constant 0 : i32
    return %c0_i32, %c0_i32_0, %c0_i32_1 : i32, i32, i32
  }
  func.func @transform_2(%arg0: i32) -> (i32, i32) {
    %c0_i32 = arith.constant 0 : i32
    %c0_i32_0 = arith.constant 0 : i32
    %c0_i32_1 = arith.constant 0 : i32
    return %c0_i32, %c0_i32_0 : i32, i32
  }
  func.func @transform_3(%arg0: i32) -> (i32, i32, i32) {
    %c0_i32 = arith.constant 0 : i32
    %c0_i32_0 = arith.constant 0 : i32
    %c0_i32_1 = arith.constant 0 : i32
    %c0_i32_2 = arith.constant 0 : i32
    return %c0_i32, %c0_i32_0, %c0_i32_1 : i32, i32, i32
  }
  func.func @transform_4(%arg0: i32) -> (i32, i32) {
    %c0_i32 = arith.constant 0 : i32
    %c0_i32_0 = arith.constant 0 : i32
    %c0_i32_1 = arith.constant 0 : i32
    return %c0_i32, %c0_i32_0 : i32, i32
  }
  func.func @transform_5(%arg0: i32) -> (i32, i32) {
    %c0_i32 = arith.constant 0 : i32
    %c0_i32_0 = arith.constant 0 : i32
    %c0_i32_1 = arith.constant 0 : i32
    return %c0_i32, %c0_i32_0 : i32, i32
  }
  func.func @transform_6(%arg0: i32) -> (i32, i32) {
    %c0_i32 = arith.constant 0 : i32
    %c0_i32_0 = arith.constant 0 : i32
    %c0_i32_1 = arith.constant 0 : i32
    return %c0_i32, %c0_i32_0 : i32, i32
  }
  func.func @transform_7(%arg0: i32) -> (i32, i32) {
    %c0_i32 = arith.constant 0 : i32
    %c0_i32_0 = arith.constant 0 : i32
    %c0_i32_1 = arith.constant 0 : i32
    return %c0_i32, %c0_i32_0 : i32, i32
  }
  func.func @transform_8(%arg0: i32) -> (i32, i32, i32) {
    %c0_i32 = arith.constant 0 : i32
    %c0_i32_0 = arith.constant 0 : i32
    %c0_i32_1 = arith.constant 0 : i32
    return %arg0, %c0_i32, %c0_i32_0 : i32, i32, i32
  }
}

</mosaic_0001>

<llo_original>
// kernel: tpu_custom_call.1
$region0: #{tpu_custom_call.1}
  #allocation0 [shape = 'u32[]', space=smem, size = 0x4, offset = 0x4, fixed_abs, tag = 'smem constant byte address 0x4 - core index']
  #allocation1 [shape = 'u32[144,128]{1,0:T(1,128)}', space=vmem, size = 0x12000, scoped, tag = 'internal scratch']
  #allocation2 [shape = 'f32[32,16]{1,0:T(8,128)}', space=vmem, size = 0x4000, scoped, tag = 'scratch operand']
  %s0 = inlined_call_operand.vmem [shape: f32[2,32,16], index: 0, kind: input, shape index: {}]
  %s1 = inlined_call_operand.vmem [shape: bf16[2,16,16], index: 1, kind: input, shape index: {}]
  %s2 = inlined_call_operand.vmem [shape: f32[2,16], index: 2, kind: input, shape index: {}]
  %s3 = inlined_call_operand.vmem [shape: bf16[2,16,16], index: 3, kind: input, shape index: {}]
  %s4 = inlined_call_operand.vmem [shape: f32[2,16], index: 4, kind: input, shape index: {}]
  %s5 = inlined_call_operand.vmem [shape: bf16[32,32], index: 5, kind: input, shape index: {}]
  %s6 = inlined_call_operand.vmem [shape: bf16[16,4], index: 6, kind: input, shape index: {}]
  %s7 = inlined_call_operand.vmem [shape: f32[4,32], index: 7, kind: input, shape index: {}]
  %s8 = inlined_call_operand.hbm [shape: f32[2,4,32], index: 8, kind: output, shape index: {}]
  %s9 = sld [smem:[#allocation0]]
  $region65: #{tpu_custom_call.1} parent=0
    _
  %s11 = ssub.s32 1, %s9
  %s12 = scalar_select 0, %s11, %s9
  $region1: #{tpu_custom_call.1} parent=0
    #allocation3 [shape = 'u8[4096]{0}', space=vmem, size = 0x1000, scoped, tag = 'output window, operand 0']
    #allocation4 [shape = 's32[2]{0}', space=sflag, size = 0x8, scoped, tag = 'scoped memory for tpu_custom_call.1']
    %13 = vsyncpa [#allocation4], 0
    %s14 = scalar_lea.sflag [#allocation4], 1
    %15 = vsyncpa %s14, 0
    loop: start=0, step=1, limit=4
    $region2: #{tpu_custom_call.1} parent=1 // loop_pre_header
      _
    $region3: #{tpu_custom_call.1} parent=1 // loop_header
      %s17 = sphi 0, %s21
      %p18 = scmp.ge.s32.totalorder %s17, 4
      %s27 = sphi 0, %s29
      %s30 = sphi 0, %s27
      %s31 = sphi 0, %s30
      %s47 = sphi 0, %s31
      %s51 = sphi 0, %s51
      %s53 = sphi 0, %s51
      %s54 = sphi 0, %s53
      %s68 = sphi 0, %s54
      %s72 = sphi 0, %s72
      %s74 = sphi 0, %s72
      %s75 = sphi 0, %s74
      %s89 = sphi 0, %s75
      %s93 = sphi 0, %s93
      %s95 = sphi 0, %s93
      %s96 = sphi 0, %s95
      %s110 = sphi 0, %s96
      %s114 = sphi 0, %s114
      %s116 = sphi 0, %s114
      %s117 = sphi 0, %s116
      %s131 = sphi 0, %s117
      %s135 = sphi 0, %s135
      %s137 = sphi 0, %s135
      %s138 = sphi 0, %s137
      %s152 = sphi 0, %s138
      %s156 = sphi 0, %s156
      %s158 = sphi 0, %s156
      %s159 = sphi 0, %s158
      %s173 = sphi 0, %s159
      %s177 = sphi 0, %s177
      %s179 = sphi 0, %s177
      %s180 = sphi 0, %s179
      %s194 = sphi 0, %s180
      %s200 = sphi 0, %s202
      %s203 = sphi 0, %s200
      %s204 = sphi 0, %s203
      %s220 = sphi 0, %s204
    $region4: #{tpu_custom_call.1} parent=1 // loop_header_branch
      %20 = sbr.rel (%p18) target = $region8
    $region5: #{tpu_custom_call.1} parent=1 // loop_body
      %s22 = ssub.s32 %s17, 1
      %s23 = ssub.s32 %s17, 2
      %s24 = sadd.s32 %s17, 1
      %s25 = ssub.s32 %s17, %s24
      %p26 = scmp.eq.s32.totalorder %s25, 0
      %s28 = sadd.s32 %s27, 1
      %s29 = scalar_select %p26, %s27, %s28
      %p32 = pneg %p26
      %p33 = scmp.eq.s32.totalorder %s17, 1
      %p34 = por %p32, %p33
      %p35 = scmp.ne.s32.totalorder %s27, %s30
      %p36 = scmp.eq.s32.totalorder %s17, 0
      %p37 = por %p35, %p36
      %p38 = scmp.ne.s32.totalorder %s27, %s30
      %p39 = scmp.eq.s32.totalorder %s22, 1
      %p40 = por %p38, %p39
      %p41 = scmp.ne.s32.totalorder %s30, %s31
      %p42 = scmp.eq.s32.totalorder %s22, 0
      %p43 = por %p41, %p42
      %p44 = scmp.ne.s32.totalorder %s30, %s31
      %p45 = scmp.eq.s32.totalorder %s23, 1
      %p46 = por %p44, %p45
      %p48 = scmp.ne.s32.totalorder %s31, %s47
      %p49 = scmp.eq.s32.totalorder %s23, 0
      %p50 = por %p48, %p49
      %s52 = sadd.s32 %s51, 1
      %p55 = scmp.eq.s32.totalorder %s17, 1
      %p56 = scmp.ne.s32.totalorder %s51, %s53
      %p57 = scmp.eq.s32.totalorder %s17, 0
      %p58 = por %p56, %p57
      %p59 = scmp.ne.s32.totalorder %s51, %s53
      %p60 = scmp.eq.s32.totalorder %s22, 1
      %p61 = por %p59, %p60
      %p62 = scmp.ne.s32.totalorder %s53, %s54
      %p63 = scmp.eq.s32.totalorder %s22, 0
      %p64 = por %p62, %p63
      %p65 = scmp.ne.s32.totalorder %s53, %s54
      %p66 = scmp.eq.s32.totalorder %s23, 1
      %p67 = por %p65, %p66
      %p69 = scmp.ne.s32.totalorder %s54, %s68
      %p70 = scmp.eq.s32.totalorder %s23, 0
      %p71 = por %p69, %p70
      %s73 = sadd.s32 %s72, 1
      %p76 = scmp.eq.s32.totalorder %s17, 1
      %p77 = scmp.ne.s32.totalorder %s72, %s74
      %p78 = scmp.eq.s32.totalorder %s17, 0
      %p79 = por %p77, %p78
      %p80 = scmp.ne.s32.totalorder %s72, %s74
      %p81 = scmp.eq.s32.totalorder %s22, 1
      %p82 = por %p80, %p81
      %p83 = scmp.ne.s32.totalorder %s74, %s75
      %p84 = scmp.eq.s32.totalorder %s22, 0
      %p85 = por %p83, %p84
      %p86 = scmp.ne.s32.totalorder %s74, %s75
      %p87 = scmp.eq.s32.totalorder %s23, 1
      %p88 = por %p86, %p87
      %p90 = scmp.ne.s32.totalorder %s75, %s89
      %p91 = scmp.eq.s32.totalorder %s23, 0
      %p92 = por %p90, %p91
      %s94 = sadd.s32 %s93, 1
      %p97 = scmp.eq.s32.totalorder %s17, 1
      %p98 = scmp.ne.s32.totalorder %s93, %s95
      %p99 = scmp.eq.s32.totalorder %s17, 0
      %p100 = por %p98, %p99
      %p101 = scmp.ne.s32.totalorder %s93, %s95
      %p102 = scmp.eq.s32.totalorder %s22, 1
      %p103 = por %p101, %p102
      %p104 = scmp.ne.s32.totalorder %s95, %s96
      %p105 = scmp.eq.s32.totalorder %s22, 0
      %p106 = por %p104, %p105
      %p107 = scmp.ne.s32.totalorder %s95, %s96
      %p108 = scmp.eq.s32.totalorder %s23, 1
      %p109 = por %p107, %p108
      %p111 = scmp.ne.s32.totalorder %s96, %s110
      %p112 = scmp.eq.s32.totalorder %s23, 0
      %p113 = por %p111, %p112
      %s115 = sadd.s32 %s114, 1
      %p118 = scmp.eq.s32.totalorder %s17, 1
      %p119 = scmp.ne.s32.totalorder %s114, %s116
      %p120 = scmp.eq.s32.totalorder %s17, 0
      %p121 = por %p119, %p120
      %p122 = scmp.ne.s32.totalorder %s114, %s116
      %p123 = scmp.eq.s32.totalorder %s22, 1
      %p124 = por %p122, %p123
      %p125 = scmp.ne.s32.totalorder %s116, %s117
      %p126 = scmp.eq.s32.totalorder %s22, 0
      %p127 = por %p125, %p126
      %p128 = scmp.ne.s32.totalorder %s116, %s117
      %p129 = scmp.eq.s32.totalorder %s23, 1
      %p130 = por %p128, %p129
      %p132 = scmp.ne.s32.totalorder %s117, %s131
      %p133 = scmp.eq.s32.totalorder %s23, 0
      %p134 = por %p132, %p133
      %s136 = sadd.s32 %s135, 1
      %p139 = scmp.eq.s32.totalorder %s17, 1
      %p140 = scmp.ne.s32.totalorder %s135, %s137
      %p141 = scmp.eq.s32.totalorder %s17, 0
      %p142 = por %p140, %p141
      %p143 = scmp.ne.s32.totalorder %s135, %s137
      %p144 = scmp.eq.s32.totalorder %s22, 1
      %p145 = por %p143, %p144
      %p146 = scmp.ne.s32.totalorder %s137, %s138
      %p147 = scmp.eq.s32.totalorder %s22, 0
      %p148 = por %p146, %p147
      %p149 = scmp.ne.s32.totalorder %s137, %s138
      %p150 = scmp.eq.s32.totalorder %s23, 1
      %p151 = por %p149, %p150
      %p153 = scmp.ne.s32.totalorder %s138, %s152
      %p154 = scmp.eq.s32.totalorder %s23, 0
      %p155 = por %p153, %p154
      %s157 = sadd.s32 %s156, 1
      %p160 = scmp.eq.s32.totalorder %s17, 1
      %p161 = scmp.ne.s32.totalorder %s156, %s158
      %p162 = scmp.eq.s32.totalorder %s17, 0
      %p163 = por %p161, %p162
      %p164 = scmp.ne.s32.totalorder %s156, %s158
      %p165 = scmp.eq.s32.totalorder %s22, 1
      %p166 = por %p164, %p165
      %p167 = scmp.ne.s32.totalorder %s158, %s159
      %p168 = scmp.eq.s32.totalorder %s22, 0
      %p169 = por %p167, %p168
      %p170 = scmp.ne.s32.totalorder %s158, %s159
      %p171 = scmp.eq.s32.totalorder %s23, 1
      %p172 = por %p170, %p171
      %p174 = scmp.ne.s32.totalorder %s159, %s173
      %p175 = scmp.eq.s32.totalorder %s23, 0
      %p176 = por %p174, %p175
      %s178 = sadd.s32 %s177, 1
      %p181 = scmp.eq.s32.totalorder %s17, 1
      %p182 = scmp.ne.s32.totalorder %s177, %s179
      %p183 = scmp.eq.s32.totalorder %s17, 0
      %p184 = por %p182, %p183
      %p185 = scmp.ne.s32.totalorder %s177, %s179
      %p186 = scmp.eq.s32.totalorder %s22, 1
      %p187 = por %p185, %p186
      %p188 = scmp.ne.s32.totalorder %s179, %s180
      %p189 = scmp.eq.s32.totalorder %s22, 0
      %p190 = por %p188, %p189
      %p191 = scmp.ne.s32.totalorder %s179, %s180
      %p192 = scmp.eq.s32.totalorder %s23, 1
      %p193 = por %p191, %p192
      %p195 = scmp.ne.s32.totalorder %s180, %s194
      %p196 = scmp.eq.s32.totalorder %s23, 0
      %p197 = por %p195, %p196
      %s198 = ssub.s32 %s17, %s24
      %p199 = scmp.eq.s32.totalorder %s198, 0
      %s201 = sadd.s32 %s200, 1
      %s202 = scalar_select %p199, %s200, %s201
      %p205 = pneg %p199
      %p206 = scmp.eq.s32.totalorder %s17, 1
      %p207 = por %p205, %p206
      %p208 = scmp.ne.s32.totalorder %s200, %s203
      %p209 = scmp.eq.s32.totalorder %s17, 0
      %p210 = por %p208, %p209
      %p211 = scmp.ne.s32.totalorder %s200, %s203
      %p212 = scmp.eq.s32.totalorder %s22, 1
      %p213 = por %p211, %p212
      %p214 = scmp.ne.s32.totalorder %s203, %s204
      %p215 = scmp.eq.s32.totalorder %s22, 0
      %p216 = por %p214, %p215
      %p217 = scmp.ne.s32.totalorder %s203, %s204
      %p218 = scmp.eq.s32.totalorder %s23, 1
      %p219 = por %p217, %p218
      %p221 = scmp.ne.s32.totalorder %s204, %s220
      %p222 = scmp.eq.s32.totalorder %s23, 0
      %p223 = por %p221, %p222
      %p224 = scmp.le.s32.totalorder 1, %s17
      %p225 = scmp.lt.s32.totalorder %s17, 3
      %p226 = pnand %p224, %p225
      %p227 = pneg %p226
      // Predicated region
      $region9: #{tpu_custom_call.1} parent=5 // pred_check
        _
      $region10: #{tpu_custom_call.1} parent=5 // pred_check_branch
        %229 = sbr.rel (%p226) target = $region12
      $region11: #{tpu_custom_call.1} parent=5 // pred_region
        %s230 = ssub.s32 %s17, 1
        // Predicated region
        $region13: #{tpu_custom_call.1} parent=11 // pred_check
          %p231 = pneg %p64
        $region14: #{tpu_custom_call.1} parent=11 // pred_check_branch
          %233 = sbr.rel (%p231) target = $region16
        $region15: #{tpu_custom_call.1} parent=11 // pred_region
          _
        $region16: #{tpu_custom_call.1} parent=11 // pred_fallthru
          _
        // Predicated region
        $region17: #{tpu_custom_call.1} parent=11 // pred_check
          %p234 = pneg %p85
        $region18: #{tpu_custom_call.1} parent=11 // pred_check_branch
          %236 = sbr.rel (%p234) target = $region20
        $region19: #{tpu_custom_call.1} parent=11 // pred_region
          _
        $region20: #{tpu_custom_call.1} parent=11 // pred_fallthru
          _
        // Predicated region
        $region21: #{tpu_custom_call.1} parent=11 // pred_check
          %p237 = pneg %p106
        $region22: #{tpu_custom_call.1} parent=11 // pred_check_branch
          %239 = sbr.rel (%p237) target = $region24
        $region23: #{tpu_custom_call.1} parent=11 // pred_region
          _
        $region24: #{tpu_custom_call.1} parent=11 // pred_fallthru
          _
        // Predicated region
        $region25: #{tpu_custom_call.1} parent=11 // pred_check
          %p240 = pneg %p127
        $region26: #{tpu_custom_call.1} parent=11 // pred_check_branch
          %242 = sbr.rel (%p240) target = $region28
        $region27: #{tpu_custom_call.1} parent=11 // pred_region
          _
        $region28: #{tpu_custom_call.1} parent=11 // pred_fallthru
          _
        // Predicated region
        $region29: #{tpu_custom_call.1} parent=11 // pred_check
          %p243 = pneg %p148
        $region30: #{tpu_custom_call.1} parent=11 // pred_check_branch
          %245 = sbr.rel (%p243) target = $region32
        $region31: #{tpu_custom_call.1} parent=11 // pred_region
          _
        $region32: #{tpu_custom_call.1} parent=11 // pred_fallthru
          _
        // Predicated region
        $region33: #{tpu_custom_call.1} parent=11 // pred_check
          %p246 = pneg %p169
        $region34: #{tpu_custom_call.1} parent=11 // pred_check_branch
          %248 = sbr.rel (%p246) target = $region36
        $region35: #{tpu_custom_call.1} parent=11 // pred_region
          _
        $region36: #{tpu_custom_call.1} parent=11 // pred_fallthru
          _
        // Predicated region
        $region37: #{tpu_custom_call.1} parent=11 // pred_check
          %p249 = pneg %p190
        $region38: #{tpu_custom_call.1} parent=11 // pred_check_branch
          %251 = sbr.rel (%p249) target = $region40
        $region39: #{tpu_custom_call.1} parent=11 // pred_region
          _
        $region40: #{tpu_custom_call.1} parent=11 // pred_fallthru
          _
      $region12: #{tpu_custom_call.1} parent=5 // pred_fallthru
        _
      %p252 = scmp.lt.s32.totalorder %s17, 2
      // Predicated region
      $region41: #{tpu_custom_call.1} parent=5 // pred_check
        %p253 = pneg %p252
      $region42: #{tpu_custom_call.1} parent=5 // pred_check_branch
        %255 = sbr.rel (%p253) target = $region44
      $region43: #{tpu_custom_call.1} parent=5 // pred_region
        // Predicated region
        $region45: #{tpu_custom_call.1} parent=43 // pred_check
          %p256 = pneg %p37
        $region46: #{tpu_custom_call.1} parent=43 // pred_check_branch
          %258 = sbr.rel (%p256) target = $region48
        $region47: #{tpu_custom_call.1} parent=43 // pred_region
          %p259 = scmp.lt.s32.totalorder %s17, 1
          %s260 = scalar_select %p259, %s17, 1
          %s261 = smul.addr %s260, 4
          %s262 = smul.addr %s261, 8
          %s263 = scalar_lea.vmem %s0, %s262
        $region48: #{tpu_custom_call.1} parent=43 // pred_fallthru
          _
      $region44: #{tpu_custom_call.1} parent=5 // pred_fallthru
        _
      %p264 = scmp.le.s32.totalorder 1, %s17
      %p265 = scmp.lt.s32.totalorder %s17, 3
      %p266 = pnand %p264, %p265
      %p267 = pneg %p266
      // Predicated region
      $region49: #{tpu_custom_call.1} parent=5 // pred_check
        _
      $region50: #{tpu_custom_call.1} parent=5 // pred_check_branch
        %269 = sbr.rel (%p266) target = $region52
      $region51: #{tpu_custom_call.1} parent=5 // pred_region
        %s270 = ssub.s32 %s17, 1
        %p271 = scmp.lt.s32.totalorder %s22, 1
        %s272 = scalar_select %p271, %s22, 1
        %s273 = smul.addr %s272, 4
        %s274 = smul.addr %s273, 8
        %s275 = scalar_lea.vmem %s0, %s274
        %p276 = pneg %p43
        %p277 = pneg %p40
        %p278 = pneg %p64
        %p279 = pneg %p61
        %p280 = pneg %p85
        %p281 = pneg %p82
        %p282 = pneg %p106
        %p283 = pneg %p103
        %p284 = pneg %p127
        %p285 = pneg %p124
        %p286 = pneg %p148
        %p287 = pneg %p145
        %p288 = pneg %p169
        %p289 = pneg %p166
        %p290 = pneg %p190
        %p291 = pneg %p187
        %p292 = pneg %p216
        %p293 = pneg %p213
        %s294 = sand.u32 %s203, 1
        %s295 = scalar_lea.sflag [#allocation4], %s294
        %s296 = sand.u32 %s203, 1
        %s297 = smul.addr %s296, 4
        %s298 = scalar_lea.vmem [#allocation3], %s297
        %p299 = scmp.lt.s32.totalorder %s22, 1
        %s300 = scalar_select %p299, %s22, 1
        %s301 = smul.addr %s300, 4
        %s302 = smul.addr %s301, 8
        %s303 = scalar_lea.vmem %s0, %s302
        %v305 = vld [vmem:[%s2] sm:$0x1]
        %v306 = vld [vmem:[%s303] sm:$0xff]
        %v307 = vld [vmem:[%s303 + $0x8] sm:$0xff]
        %v308 = vld [vmem:[%s303 + $0x10] sm:$0xff]
        %v309 = vld [vmem:[%s303 + $0x18] sm:$0xff]
        %vm310 = vcmask 130048
        %v311 = vsel %vm310, %v306, 0.0
        %312 = vadd.xlane.f32.xlu0 %v311
        %v313 = vpop.xlane.xlu0 %312
        %v314 = vsel %vm310, %v307, 0.0
        %315 = vadd.xlane.f32.xlu0 %v314
        %v316 = vpop.xlane.xlu0 %315
        %v317 = vsel %vm310, %v308, 0.0
        %318 = vadd.xlane.f32.xlu0 %v317
        %v319 = vpop.xlane.xlu0 %318
        %v320 = vsel %vm310, %v309, 0.0
        %321 = vadd.xlane.f32.xlu0 %v320
        %v322 = vpop.xlane.xlu0 %321
        %v323 = vmul.f32 %v313, 0.0625
        %v324 = vmul.f32 %v316, 0.0625
        %v325 = vmul.f32 %v319, 0.0625
        %v326 = vmul.f32 %v322, 0.0625
        %v327 = vsub.f32 %v306, %v323
        %v328 = vsub.f32 %v307, %v324
        %v329 = vsub.f32 %v308, %v325
        %v330 = vsub.f32 %v309, %v326
        %v331 = vmul.f32 %v327, %v327
        %v332 = vmul.f32 %v328, %v328
        %v333 = vmul.f32 %v329, %v329
        %v334 = vmul.f32 %v330, %v330
        %v335 = vsel %vm310, %v331, 0.0
        %336 = vadd.xlane.f32.xlu0 %v335
        %v337 = vpop.xlane.xlu0 %336
        %v338 = vsel %vm310, %v332, 0.0
        %339 = vadd.xlane.f32.xlu0 %v338
        %v340 = vpop.xlane.xlu0 %339
        %v341 = vsel %vm310, %v333, 0.0
        %342 = vadd.xlane.f32.xlu0 %v341
        %v343 = vpop.xlane.xlu0 %342
        %v344 = vsel %vm310, %v334, 0.0
        %345 = vadd.xlane.f32.xlu0 %v344
        %v346 = vpop.xlane.xlu0 %345
        %v347 = vmul.f32 %v337, 0.0625
        %v348 = vmul.f32 %v340, 0.0625
        %v349 = vmul.f32 %v343, 0.0625
        %v350 = vmul.f32 %v346, 0.0625
        %v351 = vadd.f32 %v347, 1e-05
        %v352 = vadd.f32 %v348, 1e-05
        %v353 = vadd.f32 %v349, 1e-05
        %v354 = vadd.f32 %v350, 1e-05
        %v355 = vrsqrt.pop %v351
        %v356 = vrsqrt.pop %v352
        %v357 = vrsqrt.pop %v353
        %v358 = vrsqrt.pop %v354
        %v359 = vmul.f32 %v327, %v355
        %v360 = vmul.f32 %v328, %v356
        %v361 = vmul.f32 %v329, %v357
        %v362 = vmul.f32 %v330, %v358
        %v363 = vpack.c.bf16 %v360, %v359
        %v364 = vpack.c.bf16 %v362, %v361
        %v365 = vld [vmem:[%s1] sm:$0xf]
        %v366 = vld [vmem:[%s1 + $0x4] sm:$0xf]
        %v367 = vlaneseq
        %v368 = vshrl.u32 %v367, 7
        %v369 = vsub.s32 0, %v368
        %v370 = vrot.slane %v305, %v369
        %v373 = vunpack.c.l.b16 %v365
        %v374 = vunpack.c.l.b16 %v366
        %v375 = vpack.c.b16 %v374, %v373
        %v378 = vsel %vm310, %v363, 0
        %v381 = vsel %vm310, %v364, 0
        %383 = vmatprep.subr.bf16.mxu0 0
        %384 = vmatpush1.bf16.msra.mxu0 %v375
        %385 = vmatprep.subr.bf16.mxu0 0
        %386 = vmatpush1.bf16.msra.mxu0 0
        %387 = vmatprep.subr.bf16.mxu0 0
        %388 = vmatpush1.bf16.msra.mxu0 0
        %389 = vmatprep.subr.bf16.mxu0 0
        %390 = vmatpush1.bf16.msra.mxu0 0
        %391 = vmatprep.subr.bf16.mxu0 0
        %392 = vmatpush1.bf16.msra.mxu0 0
        %393 = vmatprep.subr.bf16.mxu0 0
        %394 = vmatpush1.bf16.msra.mxu0 0
        %395 = vmatprep.subr.bf16.mxu0 0
        %396 = vmatpush1.bf16.msra.mxu0 0
        %397 = vmatprep.subr.bf16.mxu0 0
        %398 = vmatpush1.bf16.msra.mxu0 0
        %399 = vmatprep.subr.bf16.mxu0 0
        %400 = vmatpush1.bf16.msra.mxu0 0
        %401 = vmatprep.subr.bf16.mxu0 0
        %402 = vmatpush1.bf16.msra.mxu0 0
        %403 = vmatprep.subr.bf16.mxu0 0
        %404 = vmatpush1.bf16.msra.mxu0 0
        %405 = vmatprep.subr.bf16.mxu0 0
        %406 = vmatpush1.bf16.msra.mxu0 0
        %407 = vmatprep.subr.bf16.mxu0 0
        %408 = vmatpush1.bf16.msra.mxu0 0
        %409 = vmatprep.subr.bf16.mxu0 0
        %410 = vmatpush1.bf16.msra.mxu0 0
        %411 = vmatprep.subr.bf16.mxu0 0
        %412 = vmatpush1.bf16.msra.mxu0 0
        %413 = vmatprep.subr.bf16.mxu0 0
        %414 = vmatpush1.bf16.msra.mxu0 0
        %415 = vmatprep.mubr.bf16.mxu0 0
        %416 = vmatmul.mubr.bf16.gmra.mrb[0].mxu0 %v378
        %v417 = vpop.f32.mrb[0].mxu0
        %v418 = vadd.f32 %v370, %v417
        %v419 = vpop.f32.mrb[0].mxu0
        %v420 = vpop.f32.mrb[0].mxu0
        %v421 = vadd.f32 %v370, %v420
        %v422 = vpop.f32.mrb[0].mxu0
        %423 = vmatprep.mubr.bf16.mxu0 0
        %424 = vmatmul.mubr.bf16.gmra.mrb[0].mxu0 %v381
        %v425 = vpop.f32.mrb[0].mxu0
        %v426 = vadd.f32 %v370, %v425
        %v427 = vpop.f32.mrb[0].mxu0
        %v428 = vpop.f32.mrb[0].mxu0
        %v429 = vadd.f32 %v370, %v428
        %v430 = vpop.f32.mrb[0].mxu0
        %431 = vdwg.mxu0
        %v432 = vmax.f32 %v418, 0.0
        %v433 = vmax.f32 %v421, 0.0
        %v434 = vmax.f32 %v426, 0.0
        %v435 = vmax.f32 %v429, 0.0
        %v436 = vpack.c.bf16 %v433, %v432
        %v437 = vpack.c.bf16 %v435, %v434
        %v438 = vld [vmem:[%s3] sm:$0xf]
        %v439 = vld [vmem:[%s3 + $0x4] sm:$0xf]
        %v440 = vld [vmem:[%s4] sm:$0x1]
        %v441 = vlaneseq
        %v442 = vshrl.u32 %v441, 7
        %v443 = vsub.s32 0, %v442
        %v444 = vrot.slane %v440, %v443
        %v447 = vunpack.c.l.b16 %v438
        %v448 = vunpack.c.l.b16 %v439
        %v449 = vpack.c.b16 %v448, %v447
        %v452 = vsel %vm310, %v436, 0
        %v455 = vsel %vm310, %v437, 0
        %457 = vmatprep.subr.bf16.mxu0 0
        %458 = vmatpush1.bf16.msra.mxu0 %v449
        %459 = vmatprep.subr.bf16.mxu0 0
        %460 = vmatpush1.bf16.msra.mxu0 0
        %461 = vmatprep.subr.bf16.mxu0 0
        %462 = vmatpush1.bf16.msra.mxu0 0
        %463 = vmatprep.subr.bf16.mxu0 0
        %464 = vmatpush1.bf16.msra.mxu0 0
        %465 = vmatprep.subr.bf16.mxu0 0
        %466 = vmatpush1.bf16.msra.mxu0 0
        %467 = vmatprep.subr.bf16.mxu0 0
        %468 = vmatpush1.bf16.msra.mxu0 0
        %469 = vmatprep.subr.bf16.mxu0 0
        %470 = vmatpush1.bf16.msra.mxu0 0
        %471 = vmatprep.subr.bf16.mxu0 0
        %472 = vmatpush1.bf16.msra.mxu0 0
        %473 = vmatprep.subr.bf16.mxu0 0
        %474 = vmatpush1.bf16.msra.mxu0 0
        %475 = vmatprep.subr.bf16.mxu0 0
        %476 = vmatpush1.bf16.msra.mxu0 0
        %477 = vmatprep.subr.bf16.mxu0 0
        %478 = vmatpush1.bf16.msra.mxu0 0
        %479 = vmatprep.subr.bf16.mxu0 0
        %480 = vmatpush1.bf16.msra.mxu0 0
        %481 = vmatprep.subr.bf16.mxu0 0
        %482 = vmatpush1.bf16.msra.mxu0 0
        %483 = vmatprep.subr.bf16.mxu0 0
        %484 = vmatpush1.bf16.msra.mxu0 0
        %485 = vmatprep.subr.bf16.mxu0 0
        %486 = vmatpush1.bf16.msra.mxu0 0
        %487 = vmatprep.subr.bf16.mxu0 0
        %488 = vmatpush1.bf16.msra.mxu0 0
        %489 = vmatprep.mubr.bf16.mxu0 0
        %490 = vmatmul.mubr.bf16.gmra.mrb[0].mxu0 %v452
        %v491 = vpop.f32.mrb[0].mxu0
        %v492 = vadd.f32 %v444, %v491
        %v493 = vpop.f32.mrb[0].mxu0
        %v494 = vpop.f32.mrb[0].mxu0
        %v495 = vadd.f32 %v444, %v494
        %v496 = vpop.f32.mrb[0].mxu0
        %497 = vmatprep.mubr.bf16.mxu0 0
        %498 = vmatmul.mubr.bf16.gmra.mrb[0].mxu0 %v455
        %v499 = vpop.f32.mrb[0].mxu0
        %v500 = vadd.f32 %v444, %v499
        %v501 = vpop.f32.mrb[0].mxu0
        %v502 = vpop.f32.mrb[0].mxu0
        %v503 = vadd.f32 %v444, %v502
        %v504 = vpop.f32.mrb[0].mxu0
        %505 = vdwg.mxu0
        %v506 = vadd.f32 %v306, %v492
        %v507 = vadd.f32 %v307, %v495
        %v508 = vadd.f32 %v308, %v500
        %v509 = vadd.f32 %v309, %v503
        %510 = vst.msk [vmem:[#allocation2] sm:$0xff] %vm310, %v506
        %511 = vst.msk [vmem:[#allocation2 + $0x8] sm:$0xff] %vm310, %v507
        %512 = vst.msk [vmem:[#allocation2 + $0x10] sm:$0xff] %vm310, %v508
        %513 = vst.msk [vmem:[#allocation2 + $0x18] sm:$0xff] %vm310, %v509
        %v514 = vld [vmem:[%s2 + $0x1] sm:$0x1]
        %v515 = vld [vmem:[#allocation2] sm:$0xff]
        %v516 = vld [vmem:[#allocation2 + $0x8] sm:$0xff]
        %v517 = vld [vmem:[#allocation2 + $0x10] sm:$0xff]
        %v518 = vld [vmem:[#allocation2 + $0x18] sm:$0xff]
        %v519 = vsel %vm310, %v515, 0.0
        %520 = vadd.xlane.f32.xlu0 %v519
        %v521 = vpop.xlane.xlu0 %520
        %v522 = vsel %vm310, %v516, 0.0
        %523 = vadd.xlane.f32.xlu0 %v522
        %v524 = vpop.xlane.xlu0 %523
        %v525 = vsel %vm310, %v517, 0.0
        %526 = vadd.xlane.f32.xlu0 %v525
        %v527 = vpop.xlane.xlu0 %526
        %v528 = vsel %vm310, %v518, 0.0
        %529 = vadd.xlane.f32.xlu0 %v528
        %v530 = vpop.xlane.xlu0 %529
        %v531 = vmul.f32 %v521, 0.0625
        %v532 = vmul.f32 %v524, 0.0625
        %v533 = vmul.f32 %v527, 0.0625
        %v534 = vmul.f32 %v530, 0.0625
        %v535 = vsub.f32 %v515, %v531
        %v536 = vsub.f32 %v516, %v532
        %v537 = vsub.f32 %v517, %v533
        %v538 = vsub.f32 %v518, %v534
        %v539 = vmul.f32 %v535, %v535
        %v540 = vmul.f32 %v536, %v536
        %v541 = vmul.f32 %v537, %v537
        %v542 = vmul.f32 %v538, %v538
        %v543 = vsel %vm310, %v539, 0.0
        %544 = vadd.xlane.f32.xlu0 %v543
        %v545 = vpop.xlane.xlu0 %544
        %v546 = vsel %vm310, %v540, 0.0
        %547 = vadd.xlane.f32.xlu0 %v546
        %v548 = vpop.xlane.xlu0 %547
        %v549 = vsel %vm310, %v541, 0.0
        %550 = vadd.xlane.f32.xlu0 %v549
        %v551 = vpop.xlane.xlu0 %550
        %v552 = vsel %vm310, %v542, 0.0
        %553 = vadd.xlane.f32.xlu0 %v552
        %v554 = vpop.xlane.xlu0 %553
        %v555 = vmul.f32 %v545, 0.0625
        %v556 = vmul.f32 %v548, 0.0625
        %v557 = vmul.f32 %v551, 0.0625
        %v558 = vmul.f32 %v554, 0.0625
        %v559 = vadd.f32 %v555, 1e-05
        %v560 = vadd.f32 %v556, 1e-05
        %v561 = vadd.f32 %v557, 1e-05
        %v562 = vadd.f32 %v558, 1e-05
        %v563 = vrsqrt.pop %v559
        %v564 = vrsqrt.pop %v560
        %v565 = vrsqrt.pop %v561
        %v566 = vrsqrt.pop %v562
        %v567 = vmul.f32 %v535, %v563
        %v568 = vmul.f32 %v536, %v564
        %v569 = vmul.f32 %v537, %v565
        %v570 = vmul.f32 %v538, %v566
        %v571 = vpack.c.bf16 %v568, %v567
        %v572 = vpack.c.bf16 %v570, %v569
        %s573 = scalar_lea.vmem %s1, 8
        %v574 = vld [vmem:[%s573] sm:$0xf]
        %v575 = vld [vmem:[%s573 + $0x4] sm:$0xf]
        %v576 = vlaneseq
        %v577 = vshrl.u32 %v576, 7
        %v578 = vsub.s32 0, %v577
        %v579 = vrot.slane %v514, %v578
        %v582 = vunpack.c.l.b16 %v574
        %v583 = vunpack.c.l.b16 %v575
        %v584 = vpack.c.b16 %v583, %v582
        %v587 = vsel %vm310, %v571, 0
        %v590 = vsel %vm310, %v572, 0
        %592 = vmatprep.subr.bf16.mxu0 0
        %593 = vmatpush1.bf16.msra.mxu0 %v584
        %594 = vmatprep.subr.bf16.mxu0 0
        %595 = vmatpush1.bf16.msra.mxu0 0
        %596 = vmatprep.subr.bf16.mxu0 0
        %597 = vmatpush1.bf16.msra.mxu0 0
        %598 = vmatprep.subr.bf16.mxu0 0
        %599 = vmatpush1.bf16.msra.mxu0 0
        %600 = vmatprep.subr.bf16.mxu0 0
        %601 = vmatpush1.bf16.msra.mxu0 0
        %602 = vmatprep.subr.bf16.mxu0 0
        %603 = vmatpush1.bf16.msra.mxu0 0
        %604 = vmatprep.subr.bf16.mxu0 0
        %605 = vmatpush1.bf16.msra.mxu0 0
        %606 = vmatprep.subr.bf16.mxu0 0
        %607 = vmatpush1.bf16.msra.mxu0 0
        %608 = vmatprep.subr.bf16.mxu0 0
        %609 = vmatpush1.bf16.msra.mxu0 0
        %610 = vmatprep.subr.bf16.mxu0 0
        %611 = vmatpush1.bf16.msra.mxu0 0
        %612 = vmatprep.subr.bf16.mxu0 0
        %613 = vmatpush1.bf16.msra.mxu0 0
        %614 = vmatprep.subr.bf16.mxu0 0
        %615 = vmatpush1.bf16.msra.mxu0 0
        %616 = vmatprep.subr.bf16.mxu0 0
        %617 = vmatpush1.bf16.msra.mxu0 0
        %618 = vmatprep.subr.bf16.mxu0 0
        %619 = vmatpush1.bf16.msra.mxu0 0
        %620 = vmatprep.subr.bf16.mxu0 0
        %621 = vmatpush1.bf16.msra.mxu0 0
        %622 = vmatprep.subr.bf16.mxu0 0
        %623 = vmatpush1.bf16.msra.mxu0 0
        %624 = vmatprep.mubr.bf16.mxu0 0
        %625 = vmatmul.mubr.bf16.gmra.mrb[0].mxu0 %v587
        %v626 = vpop.f32.mrb[0].mxu0
        %v627 = vadd.f32 %v579, %v626
        %v628 = vpop.f32.mrb[0].mxu0
        %v629 = vpop.f32.mrb[0].mxu0
        %v630 = vadd.f32 %v579, %v629
        %v631 = vpop.f32.mrb[0].mxu0
        %632 = vmatprep.mubr.bf16.mxu0 0
        %633 = vmatmul.mubr.bf16.gmra.mrb[0].mxu0 %v590
        %v634 = vpop.f32.mrb[0].mxu0
        %v635 = vadd.f32 %v579, %v634
        %v636 = vpop.f32.mrb[0].mxu0
        %v637 = vpop.f32.mrb[0].mxu0
        %v638 = vadd.f32 %v579, %v637
        %v639 = vpop.f32.mrb[0].mxu0
        %640 = vdwg.mxu0
        %v641 = vmax.f32 %v627, 0.0
        %v642 = vmax.f32 %v630, 0.0
        %v643 = vmax.f32 %v635, 0.0
        %v644 = vmax.f32 %v638, 0.0
        %v645 = vpack.c.bf16 %v642, %v641
        %v646 = vpack.c.bf16 %v644, %v643
        %s647 = scalar_lea.vmem %s3, 8
        %v648 = vld [vmem:[%s647] sm:$0xf]
        %v649 = vld [vmem:[%s647 + $0x4] sm:$0xf]
        %v650 = vld [vmem:[%s4 + $0x1] sm:$0x1]
        %v651 = vlaneseq
        %v652 = vshrl.u32 %v651, 7
        %v653 = vsub.s32 0, %v652
        %v654 = vrot.slane %v650, %v653
        %v657 = vunpack.c.l.b16 %v648
        %v658 = vunpack.c.l.b16 %v649
        %v659 = vpack.c.b16 %v658, %v657
        %v662 = vsel %vm310, %v645, 0
        %v665 = vsel %vm310, %v646, 0
        %667 = vmatprep.subr.bf16.mxu0 0
        %668 = vmatpush1.bf16.msra.mxu0 %v659
        %669 = vmatprep.subr.bf16.mxu0 0
        %670 = vmatpush1.bf16.msra.mxu0 0
        %671 = vmatprep.subr.bf16.mxu0 0
        %672 = vmatpush1.bf16.msra.mxu0 0
        %673 = vmatprep.subr.bf16.mxu0 0
        %674 = vmatpush1.bf16.msra.mxu0 0
        %675 = vmatprep.subr.bf16.mxu0 0
        %676 = vmatpush1.bf16.msra.mxu0 0
        %677 = vmatprep.subr.bf16.mxu0 0
        %678 = vmatpush1.bf16.msra.mxu0 0
        %679 = vmatprep.subr.bf16.mxu0 0
        %680 = vmatpush1.bf16.msra.mxu0 0
        %681 = vmatprep.subr.bf16.mxu0 0
        %682 = vmatpush1.bf16.msra.mxu0 0
        %683 = vmatprep.subr.bf16.mxu0 0
        %684 = vmatpush1.bf16.msra.mxu0 0
        %685 = vmatprep.subr.bf16.mxu0 0
        %686 = vmatpush1.bf16.msra.mxu0 0
        %687 = vmatprep.subr.bf16.mxu0 0
        %688 = vmatpush1.bf16.msra.mxu0 0
        %689 = vmatprep.subr.bf16.mxu0 0
        %690 = vmatpush1.bf16.msra.mxu0 0
        %691 = vmatprep.subr.bf16.mxu0 0
        %692 = vmatpush1.bf16.msra.mxu0 0
        %693 = vmatprep.subr.bf16.mxu0 0
        %694 = vmatpush1.bf16.msra.mxu0 0
        %695 = vmatprep.subr.bf16.mxu0 0
        %696 = vmatpush1.bf16.msra.mxu0 0
        %697 = vmatprep.subr.bf16.mxu0 0
        %698 = vmatpush1.bf16.msra.mxu0 0
        %699 = vmatprep.mubr.bf16.mxu0 0
        %700 = vmatmul.mubr.bf16.gmra.mrb[0].mxu0 %v662
        %v701 = vpop.f32.mrb[0].mxu0
        %v702 = vadd.f32 %v654, %v701
        %v703 = vpop.f32.mrb[0].mxu0
        %v704 = vpop.f32.mrb[0].mxu0
        %v705 = vadd.f32 %v654, %v704
        %v706 = vpop.f32.mrb[0].mxu0
        %707 = vmatprep.mubr.bf16.mxu0 0
        %708 = vmatmul.mubr.bf16.gmra.mrb[0].mxu0 %v665
        %v709 = vpop.f32.mrb[0].mxu0
        %v710 = vadd.f32 %v654, %v709
        %v711 = vpop.f32.mrb[0].mxu0
        %v712 = vpop.f32.mrb[0].mxu0
        %v713 = vadd.f32 %v654, %v712
        %v714 = vpop.f32.mrb[0].mxu0
        %715 = vdwg.mxu0
        %v716 = vadd.f32 %v515, %v702
        %v717 = vadd.f32 %v516, %v705
        %v718 = vadd.f32 %v517, %v710
        %v719 = vadd.f32 %v518, %v713
        %720 = vst.msk [vmem:[#allocation2] sm:$0xff] %vm310, %v716
        %721 = vst.msk [vmem:[#allocation2 + $0x8] sm:$0xff] %vm310, %v717
        %722 = vst.msk [vmem:[#allocation2 + $0x10] sm:$0xff] %vm310, %v718
        %723 = vst.msk [vmem:[#allocation2 + $0x18] sm:$0xff] %vm310, %v719
        %v724 = vld [vmem:[#allocation2] sm:$0xff]
        %v725 = vld [vmem:[#allocation2 + $0x8] sm:$0xff]
        %v726 = vld [vmem:[#allocation2 + $0x10] sm:$0xff]
        %v727 = vld [vmem:[#allocation2 + $0x18] sm:$0xff]
        %v728 = vpack.c.bf16 %v725, %v724
        %v729 = vpack.c.bf16 %v727, %v726
        %v730 = vld [vmem:[%s6] sm:$0xf]
        %v731 = vld [vmem:[%s6 + $0x4] sm:$0xf]
        %v734 = vunpack.c.l.b16 %v730
        %v735 = vunpack.c.l.b16 %v731
        %v736 = vpack.c.b16 %v735, %v734
        %v739 = vsel %vm310, %v728, 0
        %v742 = vsel %vm310, %v729, 0
        %744 = vmatprep.subr.bf16.mxu0 0
        %745 = vmatpush1.bf16.msra.mxu0 %v736
        %746 = vmatprep.subr.bf16.mxu0 0
        %747 = vmatpush1.bf16.msra.mxu0 0
        %748 = vmatprep.subr.bf16.mxu0 0
        %749 = vmatpush1.bf16.msra.mxu0 0
        %750 = vmatprep.subr.bf16.mxu0 0
        %751 = vmatpush1.bf16.msra.mxu0 0
        %752 = vmatprep.subr.bf16.mxu0 0
        %753 = vmatpush1.bf16.msra.mxu0 0
        %754 = vmatprep.subr.bf16.mxu0 0
        %755 = vmatpush1.bf16.msra.mxu0 0
        %756 = vmatprep.subr.bf16.mxu0 0
        %757 = vmatpush1.bf16.msra.mxu0 0
        %758 = vmatprep.subr.bf16.mxu0 0
        %759 = vmatpush1.bf16.msra.mxu0 0
        %760 = vmatprep.subr.bf16.mxu0 0
        %761 = vmatpush1.bf16.msra.mxu0 0
        %762 = vmatprep.subr.bf16.mxu0 0
        %763 = vmatpush1.bf16.msra.mxu0 0
        %764 = vmatprep.subr.bf16.mxu0 0
        %765 = vmatpush1.bf16.msra.mxu0 0
        %766 = vmatprep.subr.bf16.mxu0 0
        %767 = vmatpush1.bf16.msra.mxu0 0
        %768 = vmatprep.subr.bf16.mxu0 0
        %769 = vmatpush1.bf16.msra.mxu0 0
        %770 = vmatprep.subr.bf16.mxu0 0
        %771 = vmatpush1.bf16.msra.mxu0 0
        %772 = vmatprep.subr.bf16.mxu0 0
        %773 = vmatpush1.bf16.msra.mxu0 0
        %774 = vmatprep.subr.bf16.mxu0 0
        %775 = vmatpush1.bf16.msra.mxu0 0
        %776 = vmatprep.mubr.bf16.mxu0 0
        %777 = vmatmul.mubr.bf16.gmra.mrb[0].mxu0 %v739
        %v778 = vpop.f32.mrb[0].mxu0
        %v779 = vadd.f32 0.0, %v778
        %v780 = vpop.f32.mrb[0].mxu0
        %v781 = vpop.f32.mrb[0].mxu0
        %v782 = vadd.f32 0.0, %v781
        %v783 = vpop.f32.mrb[0].mxu0
        %784 = vmatprep.mubr.bf16.mxu0 0
        %785 = vmatmul.mubr.bf16.gmra.mrb[0].mxu0 %v742
        %v786 = vpop.f32.mrb[0].mxu0
        %v787 = vadd.f32 0.0, %v786
        %v788 = vpop.f32.mrb[0].mxu0
        %v789 = vpop.f32.mrb[0].mxu0
        %v790 = vadd.f32 0.0, %v789
        %v791 = vpop.f32.mrb[0].mxu0
        %792 = vdwg.mxu0
        %v793 = vpack.c.bf16 %v782, %v779
        %v794 = vpack.c.bf16 %v790, %v787
        %v795 = vld [vmem:[%s5] sm:$0xf]
        %v796 = vld [vmem:[%s5 + $0x4] sm:$0xf]
        %v797 = vld [vmem:[%s5 + $0x8] sm:$0xf]
        %v798 = vld [vmem:[%s5 + $0xc] sm:$0xf]
        %v799 = vld [vmem:[%s7] sm:$0xf]
        %800 = vxpose.xlu0.c.b16.start [1/8] %v793, 128
        %801 = vxpose.xlu0.c.b16.cont [2/8] %v794, 128
        %802 = vxpose.xlu0.c.b16.cont [3/8] 0, 128
        %803 = vxpose.xlu0.c.b16.cont [4/8] 0, 128
        %804 = vxpose.xlu0.c.b16.cont [5/8] 0, 128
        %805 = vxpose.xlu0.c.b16.cont [6/8] 0, 128
        %806 = vxpose.xlu0.c.b16.cont [7/8] 0, 128
        %807 = vxpose.xlu0.c.b16.end [8/8] 0, 128
        %v808 = vpop.trf.xlu0
        %v809 = vpop.trf.xlu0
        %v810 = vpop.trf.xlu0
        %v811 = vpop.trf.xlu0
        %v812 = vpop.trf.xlu0
        %v813 = vpop.trf.xlu0
        %v814 = vpop.trf.xlu0
        %v815 = vpop.trf.xlu0
        %v820 = vunpack.c.l.b16 %v795
        %v821 = vunpack.c.l.b16 %v796
        %v822 = vunpack.c.l.b16 %v797
        %v823 = vunpack.c.l.b16 %v798
        %v824 = vpack.c.b16 %v821, %v820
        %v825 = vpack.c.b16 %v823, %v822
        %vm828 = vcmask 261120
        %v830 = vsel %vm828, %v808, 0
        %832 = vmatprep.subr.bf16.mxu0 0
        %833 = vmatpush1.bf16.msra.mxu0 %v824
        %834 = vmatprep.subr.bf16.mxu0 0
        %835 = vmatpush1.bf16.msra.mxu0 %v825
        %836 = vmatprep.subr.bf16.mxu0 0
        %837 = vmatpush1.bf16.msra.mxu0 0
        %838 = vmatprep.subr.bf16.mxu0 0
        %839 = vmatpush1.bf16.msra.mxu0 0
        %840 = vmatprep.subr.bf16.mxu0 0
        %841 = vmatpush1.bf16.msra.mxu0 0
        %842 = vmatprep.subr.bf16.mxu0 0
        %843 = vmatpush1.bf16.msra.mxu0 0
        %844 = vmatprep.subr.bf16.mxu0 0
        %845 = vmatpush1.bf16.msra.mxu0 0
        %846 = vmatprep.subr.bf16.mxu0 0
        %847 = vmatpush1.bf16.msra.mxu0 0
        %848 = vmatprep.subr.bf16.mxu0 0
        %849 = vmatpush1.bf16.msra.mxu0 0
        %850 = vmatprep.subr.bf16.mxu0 0
        %851 = vmatpush1.bf16.msra.mxu0 0
        %852 = vmatprep.subr.bf16.mxu0 0
        %853 = vmatpush1.bf16.msra.mxu0 0
        %854 = vmatprep.subr.bf16.mxu0 0
        %855 = vmatpush1.bf16.msra.mxu0 0
        %856 = vmatprep.subr.bf16.mxu0 0
        %857 = vmatpush1.bf16.msra.mxu0 0
        %858 = vmatprep.subr.bf16.mxu0 0
        %859 = vmatpush1.bf16.msra.mxu0 0
        %860 = vmatprep.subr.bf16.mxu0 0
        %861 = vmatpush1.bf16.msra.mxu0 0
        %862 = vmatprep.subr.bf16.mxu0 0
        %863 = vmatpush1.bf16.msra.mxu0 0
        %864 = vmatprep.mubr.bf16.mxu0 0
        %865 = vmatmul.mubr.bf16.gmra.mrb[0].mxu0 %v830
        %v866 = vpop.f32.mrb[0].mxu0
        %v867 = vadd.f32 %v799, %v866
        %v868 = vpop.f32.mrb[0].mxu0
        %v869 = vpop.f32.mrb[0].mxu0
        %v870 = vpop.f32.mrb[0].mxu0
        %871 = vdwg.mxu0
        %v872 = vmul.f32 %v867, %v867
        %vm873 = vcmask 257024
        %v874 = vsel %vm873, %v872, 0.0
        %875 = vadd.xlane.f32.xlu0 %v874
        %v876 = vpop.xlane.xlu0 %875
        %v877 = vrot.slane %v876, 4
        %v878 = vadd.f32 %v876, %v877
        %v879 = vrot.slane %v878, 2
        %v880 = vadd.f32 %v878, %v879
        %v881 = vrot.slane %v880, 1
        %v882 = vadd.f32 %v880, %v881
        %s883 = vtos %v882
        %s884 = smax.f32 %s883, 1e-24
        %v885 = vstv %s884
        %v886 = vrsqrt.pop %v885
        %s887 = vtos %v886
        %v888 = vstv %s887
        %v889 = vmul.f32 %v867, %v888
        %890 = vst.msk [vmem:[%s298] sm:$0xf] %vm873, %v889
        %s891 = sand.u32 %s203, 1
        %s892 = scalar_lea.sflag [#allocation4], %s891
        %s893 = sand.u32 %s203, 1
        %s894 = smul.addr %s893, 4
        %s895 = scalar_lea.vmem [#allocation3], %s894
        // Predicated region
        $region53: #{tpu_custom_call.1} parent=51 // pred_check
          %p896 = pneg %p213
        $region54: #{tpu_custom_call.1} parent=51 // pred_check_branch
          %898 = sbr.rel (%p896) target = $region56
        $region55: #{tpu_custom_call.1} parent=51 // pred_region
          %s900 = ssub.s32 64, 64
          %901 = vsyncadd %s892, %s900
          %s902 = smul.addr %s22, 64
          %s903 = scalar_lea.hbm %s8, %s902
          %s905 = sshll.u32 %s895, 4
          %s906 = int_to_ptr.vmem [resolvable:$true] %s905
          %908 = dma.vmem_to_hbm [thread:$0]  %s906, 64, %s903, %s892
        $region56: #{tpu_custom_call.1} parent=51 // pred_fallthru
          _
      $region52: #{tpu_custom_call.1} parent=5 // pred_fallthru
        _
      %p909 = scmp.le.s32.totalorder 2, %s17
      // Predicated region
      $region57: #{tpu_custom_call.1} parent=5 // pred_check
        %p910 = pneg %p909
      $region58: #{tpu_custom_call.1} parent=5 // pred_check_branch
        %912 = sbr.rel (%p910) target = $region60
      $region59: #{tpu_custom_call.1} parent=5 // pred_region
        %s913 = ssub.s32 %s17, 2
        // Predicated region
        $region61: #{tpu_custom_call.1} parent=59 // pred_check
          %p914 = pneg %p219
        $region62: #{tpu_custom_call.1} parent=59 // pred_check_branch
          %916 = sbr.rel (%p914) target = $region64
        $region63: #{tpu_custom_call.1} parent=59 // pred_region
          %s917 = sand.u32 %s204, 1
          %s918 = scalar_lea.sflag [#allocation4], %s917
          %s919 = sand.u32 %s204, 1
          %s920 = smul.addr %s919, 4
          %s921 = scalar_lea.vmem [#allocation3], %s920
          %922 = dma.done %s918, 64
        $region64: #{tpu_custom_call.1} parent=59 // pred_fallthru
          _
      $region60: #{tpu_custom_call.1} parent=5 // pred_fallthru
        _
    $region6: #{tpu_custom_call.1} parent=1 // loop_footer
      %s21 = sadd.s32 1, %s17
    $region7: #{tpu_custom_call.1} parent=1 // loop_footer_branch
      %16 = sbr.rel target = $region3
    $region8: #{tpu_custom_call.1} parent=1 // loop_exit
      _
    %923 = vsyncpa [#allocation4], 1
    %s924 = scalar_lea.sflag [#allocation4], 1
    %925 = vsyncpa %s924, 1

</llo_original>
